<compile_context>
chip_gen: v7x
topology: tpu7x:2x2x1
jax: 0.10.0
libtpu: 0.0.40
codegen_flags: <defaults>
</compile_context>

<pallas_src>
import jax
import jax.numpy as jnp
from jax import lax
from jax.experimental import pallas as pl
from jax.experimental.pallas import tpu as pltpu


_INFLIGHT = 16   # outstanding row-gather DMAs (HBM-gather fallback path)
_UNROLL = 4      # manual unroll factor for the fallback steady-state loop


def _round_up(x: int, m: int) -> int:
    return ((x + m - 1) // m) * m


def _vmem_table_budget_bytes() -> int:
    """VMEM we are willing to spend keeping the embedding table resident."""
    try:
        cap = pltpu.get_tpu_info().vmem_capacity_bytes
    except Exception:
        cap = 64 << 20  # conservative: assume the smallest (v7x) physical VMEM
    # Leave plenty of room for double-buffered id/output blocks and compiler
    # scratch: ~25 MiB table cap on v7x (64 MiB), ~51 MiB on v5e/v6e (128 MiB).
    return min(int(cap * 0.4), 100 << 20)


# ----------------------------------------------------------------------------
# Default path: table resident in VMEM, gather via one-hot matmul on the MXU.
# ----------------------------------------------------------------------------
def _onehot_lookup_kernel(ids_ref, table_ref, out_ref):
    """out[t, :] = table[ids[t], :].

    ids_ref  : VMEM (bt, 1) int32  - this block's token ids
    table_ref: VMEM (V, D)         - full table, resident across the grid
    out_ref  : VMEM (bt, D)
    """
    bt = out_ref.shape[0]
    V = table_ref.shape[0]
    # (bt, V) one-hot from an iota compare; VPU work on an otherwise idle unit.
    one_hot = ids_ref[...] == lax.broadcasted_iota(jnp.int32, (bt, V), 1)
    # Exact: each output row is 1.0 * one table row, accumulated in f32.
    out_ref[...] = jnp.dot(
        one_hot.astype(table_ref.dtype), table_ref[...],
        preferred_element_type=jnp.float32).astype(out_ref.dtype)


def _forward_resident(ids, table, bt, n_pad):
    V, D = table.shape
    n_blocks = n_pad // bt
    itemsize = jnp.dtype(table.dtype).itemsize

    # VMEM actually needed: resident table + double-buffered id/output blocks.
    vmem_needed = V * D * itemsize + 2 * bt * 4 + 2 * bt * D * itemsize
    # Raise v5e/v6e/v7x scoped defaults as needed, cap under v7x's 64 MiB.
    vmem_limit = int(min(max(2 * vmem_needed, 16 << 20), 60 << 20))

    cost = pl.CostEstimate(
        flops=2 * n_pad * V * D,
        transcendentals=0,
        bytes_accessed=int(V * D * itemsize + n_pad * 4 + n_pad * D * itemsize),
    )

    return pl.pallas_call(
        _onehot_lookup_kernel,
        out_shape=jax.ShapeDtypeStruct((n_pad, D), table.dtype),
        grid=(n_blocks,),
        in_specs=[
            pl.BlockSpec((bt, 1), lambda i: (i, 0)),   # ids block (VMEM)
            pl.BlockSpec((V, D), lambda i: (0, 0)),    # table, resident in VMEM
        ],
        out_specs=pl.BlockSpec((bt, D), lambda i: (i, 0)),
        compiler_params=pltpu.CompilerParams(
            dimension_semantics=("parallel",),
            vmem_limit_bytes=vmem_limit),
        cost_estimate=cost,
    )(ids.reshape(n_pad, 1), table)


# ----------------------------------------------------------------------------
# Fallback path: huge vocab, table stays in HBM, manual DMA row gather.
# ----------------------------------------------------------------------------
def _gather_lookup_kernel(ids_smem, table_hbm, out_ref, copy_sems):
    """Gather one block of rows from the HBM table into the output block.

    ids_smem : SMEM (bt,) int32 - this block's token ids (per-block staged)
    table_hbm: HBM  (V, D)      - embedding table (memory_space=pl.ANY)
    out_ref  : VMEM (bt, D)     - row DMAs land here directly
    copy_sems: DMA semaphores (_INFLIGHT,)
    """
    bt = out_ref.shape[0]
    n_prime = min(_INFLIGHT, bt)

    def start_copy(t, row):
        pltpu.make_async_copy(
            table_hbm.at[row], out_ref.at[t], copy_sems.at[t % _INFLIGHT]
        ).start()

    def wait_copy(t):
        # wait() only needs the transfer size + semaphore slot; use an
        # id-independent source so no SMEM read happens after a wait.
        pltpu.make_async_copy(
            table_hbm.at[0], out_ref.at[t], copy_sems.at[t % _INFLIGHT]
        ).wait()

    # Prime the ring: keep up to _INFLIGHT row fetches in flight.
    @pl.loop(0, n_prime, unroll=True)
    def _(t):
        start_copy(t, ids_smem[t])

    # Steady state, manually unrolled by _UNROLL (bt is a multiple of 8).
    @pl.loop(0, bt // _UNROLL)
    def _(blk):
        base = pl.multiple_of(blk * _UNROLL, _UNROLL)
        for u in range(_UNROLL):
            t = base + u
            nxt = t + n_prime
            # Hoist the next-id SMEM read ABOVE the wait (.wait() breaks
            # SMEM sst->sld forwarding).
            row_next = ids_smem[jnp.minimum(nxt, bt - 1)]
            wait_copy(t)

            @pl.when(nxt < bt)
            def _(row_next=row_next, nxt=nxt):
                start_copy(nxt, row_next)


def _forward_hbm_gather(ids, table, bt, n_pad):
    V, D = table.shape
    n_blocks = n_pad // bt
    itemsize = jnp.dtype(table.dtype).itemsize

    cost = pl.CostEstimate(
        flops=0,
        transcendentals=0,
        bytes_accessed=int(2 * n_pad * D * itemsize + n_pad * 4),
    )

    return pl.pallas_call(
        _gather_lookup_kernel,
        out_shape=jax.ShapeDtypeStruct((n_pad, D), table.dtype),
        grid=(n_blocks,),
        in_specs=[
            # Per-block ids staged into SMEM (bounded footprint, pipelined).
            pl.BlockSpec((bt,), lambda i: (i,),
                         memory_space=pltpu.MemorySpace.SMEM),
            # Table stays in HBM; rows gathered with manual DMAs.
            pl.BlockSpec(memory_space=pl.ANY),
        ],
        out_specs=pl.BlockSpec((bt, D), lambda i: (i, 0)),
        scratch_shapes=[pltpu.SemaphoreType.DMA((_INFLIGHT,))],
        compiler_params=pltpu.CompilerParams(
            dimension_semantics=("parallel",)),
        cost_estimate=cost,
    )(ids, table)


# ----------------------------------------------------------------------------
# Public forward (equivalent of BigramLM.forward).
# ----------------------------------------------------------------------------
def bigram_lm_forward(input_ids: jax.Array, embedding_table: jax.Array,
                      *, block_tokens: int = 256,
                      force_hbm_gather: bool = False) -> jax.Array:
    """emb = embedding(input): out[b, t, :] = table[input[b, t], :]."""
    B, T = input_ids.shape
    V, D = embedding_table.shape
    N = B * T

    # Block size: big enough to amortize the ~0.35us per-grid-step overhead,
    # but split small inputs into >= 2 blocks so both v7x TCs get work.
    bt = min(block_tokens, _round_up(max((N + 1) // 2, 8), 8))
    n_pad = _round_up(N, bt)

    # nn.Embedding would raise on out-of-range ids; we clamp instead (OOB ids
    # map to valid rows) -- documented semantic divergence.
    ids = jnp.clip(input_ids.reshape(-1), 0, V - 1).astype(jnp.int32)
    if n_pad != N:
        ids = jnp.pad(ids, (0, n_pad - N))   # padded rows fetch row 0, sliced off

    table_bytes = V * D * jnp.dtype(embedding_table.dtype).itemsize
    if (not force_hbm_gather) and table_bytes <= _vmem_table_budget_bytes():
        out_flat = _forward_resident(ids, embedding_table, bt, n_pad)
    else:
        out_flat = _forward_hbm_gather(ids, embedding_table, bt, n_pad)

    return out_flat[:N].reshape(B, T, D)


if __name__ == "__main__":
    # Small deterministic setup consistent with the module:
    #   embedding_dim = 64, vocab derived from the "encoded text".
    embedding_dim = 64
    vocab_size = 32
    B, T = 2, 8

    key = jax.random.PRNGKey(0)
    k_emb, k_ids = jax.random.split(key)

    # nn.Embedding default init: N(0, 1).  Kept f32 to match nn.Embedding
    # numerics exactly (a bf16 table halves traffic on v6e/v7x if acceptable).
    embedding_table = jax.random.normal(
        k_emb, (vocab_size, embedding_dim), dtype=jnp.float32)
    input_ids = jax.random.randint(
        k_ids, (B, T), minval=0, maxval=vocab_size, dtype=jnp.int32)

    ref = embedding_table[input_ids]

    # Default path: VMEM-resident table + one-hot MXU gather.
    out = jax.block_until_ready(bigram_lm_forward(input_ids, embedding_table))
    assert out.shape == (B, T, embedding_dim)
    assert jnp.allclose(out, ref, atol=1e-6), "resident path mismatch"

    # Fallback path (exercised for coverage): HBM table, DMA row gather.
    out_hbm = jax.block_until_ready(
        bigram_lm_forward(input_ids, embedding_table, force_hbm_gather=True))
    assert jnp.allclose(out_hbm, ref, atol=1e-6), "HBM-gather path mismatch"

    print("KERNEL_OK")
</pallas_src>

<mosaic_0001>
module attributes {stable_mosaic.version = 11 : i64} {
  func.func @_onehot_lookup_kernel(%arg0: i32, %arg1: memref<8x1xi32, #tpu.memory_space<vmem>>, %arg2: memref<32x64xf32, #tpu.memory_space<vmem>>, %arg3: memref<8x64xf32, #tpu.memory_space<vmem>>) attributes {dimension_semantics = [#tpu.dimension_semantics<parallel>], iteration_bounds = array<i64: 2>, scalar_prefetch = 0 : i64, scratch_operands = 0 : i64, tpu.core_type = #tpu.core_type<tc>, window_params = [{transform_indices = @transform_0, window_bounds = array<i64: 8, 1>}, {pipeline_mode = #tpu.pipeline_mode<synchronous>, transform_indices = @transform_1, window_bounds = array<i64: 32, 64>}, {transform_indices = @transform_2, window_bounds = array<i64: 8, 64>}]} {
    %c0 = arith.constant 0 : index
    %c0_0 = arith.constant 0 : index
    %0 = vector.load %arg1[%c0, %c0_0] : memref<8x1xi32, #tpu.memory_space<vmem>>, vector<8x1xi32>
    %1 = tpu.iota {dimensions = array<i32: 1>} : vector<8x32xi32>
    %2 = vector.broadcast %0 : vector<8x1xi32> to vector<8x32xi32>
    %3 = arith.cmpi eq, %2, %1 : vector<8x32xi32>
    %4 = arith.extui %3 : vector<8x32xi1> to vector<8x32xi32>
    %5 = arith.sitofp %4 : vector<8x32xi32> to vector<8x32xf32>
    %c0_1 = arith.constant 0 : index
    %c0_2 = arith.constant 0 : index
    %6 = vector.load %arg2[%c0_1, %c0_2] : memref<32x64xf32, #tpu.memory_space<vmem>>, vector<32x64xf32>
    %cst = arith.constant dense<0.000000e+00> : vector<8x64xf32>
    %7 = tpu.matmul %5, %6, %cst {dimension_numbers = #tpu.dot_dimension_numbers<[1], [0], [0], [1], [0, 0, 1, 1], [], []>} : vector<8x32xf32>, vector<32x64xf32>, vector<8x64xf32> -> vector<8x64xf32>
    %c0_3 = arith.constant 0 : index
    %c0_4 = arith.constant 0 : index
    %8 = vector.load %arg3[%c0_3, %c0_4] : memref<8x64xf32, #tpu.memory_space<vmem>>, vector<8x64xf32>
    tpu.vector_store %arg3[%c0_3, %c0_4], %7 {strides = array<i32>} : memref<8x64xf32, #tpu.memory_space<vmem>>, vector<8x64xf32>,
    return
  }
  func.func @transform_0(%arg0: i32) -> (i32, i32) {
    %c0_i32 = arith.constant 0 : i32
    %c0_i32_0 = arith.constant 0 : i32
    return %arg0, %c0_i32 : i32, i32
  }
  func.func @transform_1(%arg0: i32) -> (i32, i32) {
    %c0_i32 = arith.constant 0 : i32
    %c0_i32_0 = arith.constant 0 : i32
    %c0_i32_1 = arith.constant 0 : i32
    return %c0_i32, %c0_i32_0 : i32, i32
  }
  func.func @transform_2(%arg0: i32) -> (i32, i32) {
    %c0_i32 = arith.constant 0 : i32
    %c0_i32_0 = arith.constant 0 : i32
    return %arg0, %c0_i32 : i32, i32
  }
}

</mosaic_0001>

<llo_original>
// kernel: tpu_custom_call.1
$region0: #{tpu_custom_call.1}
  #allocation0 [shape = 'u32[]', space=smem, size = 0x4, offset = 0x4, fixed_abs, tag = 'smem constant byte address 0x4 - core index']
  #allocation1 [shape = 'u32[144,128]{1,0:T(1,128)}', space=vmem, size = 0x12000, scoped, tag = 'internal scratch']
  %s0 = inlined_call_operand.vmem [shape: s32[16,1], index: 0, kind: input, shape index: {}]
  %s1 = inlined_call_operand.hbm [shape: f32[32,64], index: 1, kind: input, shape index: {}]
  %s2 = inlined_call_operand.hbm [shape: f32[16,64], index: 2, kind: output, shape index: {}]
  %s3 = sld [smem:[#allocation0]]
  $region45: #{tpu_custom_call.1} parent=0
    _
  %s5 = ssub.s32 1, %s3
  %s6 = scalar_select 0, %s5, %s3
  $region1: #{tpu_custom_call.1} parent=0
    #allocation2 [shape = 'u8[16384]{0}', space=vmem, size = 0x4000, scoped, tag = 'input window, operand 1, single buffered']
    #allocation3 [shape = 's32[2]{0}', space=sflag, size = 0x8, scoped, tag = 'scoped memory for tpu_custom_call.1']
    #allocation4 [shape = 's32[2]{0}', space=sflag, size = 0x8, scoped, tag = 'scoped memory for tpu_custom_call.1']
    #allocation5 [shape = 'u8[8192]{0}', space=vmem, size = 0x2000, scoped, tag = 'output window, operand 0']
    %7 = vsyncpa [#allocation3], 0
    %8 = vsyncpa [#allocation4], 0
    %s9 = scalar_lea.sflag [#allocation4], 1
    %10 = vsyncpa %s9, 0
    loop: start=0, step=1, limit=4
    $region2: #{tpu_custom_call.1} parent=1 // loop_pre_header
      _
    $region3: #{tpu_custom_call.1} parent=1 // loop_header
      %s12 = sphi 0, %s16
      %p13 = scmp.ge.s32.totalorder %s12, 4
      %s22 = sphi 0, %s24
      %s25 = sphi 0, %s22
      %s26 = sphi 0, %s25
      %s42 = sphi 0, %s26
      %s46 = sphi 0, %s46
      %s48 = sphi 0, %s46
      %s49 = sphi 0, %s48
      %s63 = sphi 0, %s49
      %s69 = sphi 0, %s71
      %s72 = sphi 0, %s69
      %s73 = sphi 0, %s72
      %s89 = sphi 0, %s73
    $region4: #{tpu_custom_call.1} parent=1 // loop_header_branch
      %15 = sbr.rel (%p13) target = $region8
    $region5: #{tpu_custom_call.1} parent=1 // loop_body
      %s17 = ssub.s32 %s12, 1
      %s18 = ssub.s32 %s12, 2
      %s19 = sadd.s32 %s12, 1
      %s20 = ssub.s32 %s12, %s19
      %p21 = scmp.eq.s32.totalorder %s20, 0
      %s23 = sadd.s32 %s22, 1
      %s24 = scalar_select %p21, %s22, %s23
      %p27 = pneg %p21
      %p28 = scmp.eq.s32.totalorder %s12, 1
      %p29 = por %p27, %p28
      %p30 = scmp.ne.s32.totalorder %s22, %s25
      %p31 = scmp.eq.s32.totalorder %s12, 0
      %p32 = por %p30, %p31
      %p33 = scmp.ne.s32.totalorder %s22, %s25
      %p34 = scmp.eq.s32.totalorder %s17, 1
      %p35 = por %p33, %p34
      %p36 = scmp.ne.s32.totalorder %s25, %s26
      %p37 = scmp.eq.s32.totalorder %s17, 0
      %p38 = por %p36, %p37
      %p39 = scmp.ne.s32.totalorder %s25, %s26
      %p40 = scmp.eq.s32.totalorder %s18, 1
      %p41 = por %p39, %p40
      %p43 = scmp.ne.s32.totalorder %s26, %s42
      %p44 = scmp.eq.s32.totalorder %s18, 0
      %p45 = por %p43, %p44
      %s47 = sadd.s32 %s46, 1
      %p50 = scmp.eq.s32.totalorder %s12, 1
      %p51 = scmp.ne.s32.totalorder %s46, %s48
      %p52 = scmp.eq.s32.totalorder %s12, 0
      %p53 = por %p51, %p52
      %p54 = scmp.ne.s32.totalorder %s46, %s48
      %p55 = scmp.eq.s32.totalorder %s17, 1
      %p56 = por %p54, %p55
      %p57 = scmp.ne.s32.totalorder %s48, %s49
      %p58 = scmp.eq.s32.totalorder %s17, 0
      %p59 = por %p57, %p58
      %p60 = scmp.ne.s32.totalorder %s48, %s49
      %p61 = scmp.eq.s32.totalorder %s18, 1
      %p62 = por %p60, %p61
      %p64 = scmp.ne.s32.totalorder %s49, %s63
      %p65 = scmp.eq.s32.totalorder %s18, 0
      %p66 = por %p64, %p65
      %s67 = ssub.s32 %s12, %s19
      %p68 = scmp.eq.s32.totalorder %s67, 0
      %s70 = sadd.s32 %s69, 1
      %s71 = scalar_select %p68, %s69, %s70
      %p74 = pneg %p68
      %p75 = scmp.eq.s32.totalorder %s12, 1
      %p76 = por %p74, %p75
      %p77 = scmp.ne.s32.totalorder %s69, %s72
      %p78 = scmp.eq.s32.totalorder %s12, 0
      %p79 = por %p77, %p78
      %p80 = scmp.ne.s32.totalorder %s69, %s72
      %p81 = scmp.eq.s32.totalorder %s17, 1
      %p82 = por %p80, %p81
      %p83 = scmp.ne.s32.totalorder %s72, %s73
      %p84 = scmp.eq.s32.totalorder %s17, 0
      %p85 = por %p83, %p84
      %p86 = scmp.ne.s32.totalorder %s72, %s73
      %p87 = scmp.eq.s32.totalorder %s18, 1
      %p88 = por %p86, %p87
      %p90 = scmp.ne.s32.totalorder %s73, %s89
      %p91 = scmp.eq.s32.totalorder %s18, 0
      %p92 = por %p90, %p91
      %p93 = scmp.le.s32.totalorder 1, %s12
      %p94 = scmp.lt.s32.totalorder %s12, 3
      %p95 = pnand %p93, %p94
      %p96 = pneg %p95
      // Predicated region
      $region9: #{tpu_custom_call.1} parent=5 // pred_check
        _
      $region10: #{tpu_custom_call.1} parent=5 // pred_check_branch
        %98 = sbr.rel (%p95) target = $region12
      $region11: #{tpu_custom_call.1} parent=5 // pred_region
        %s99 = ssub.s32 %s12, 1
        // Predicated region
        $region13: #{tpu_custom_call.1} parent=11 // pred_check
          %p100 = pneg %p59
        $region14: #{tpu_custom_call.1} parent=11 // pred_check_branch
          %102 = sbr.rel (%p100) target = $region16
        $region15: #{tpu_custom_call.1} parent=11 // pred_region
          %s104 = ssub.s32 512, 512
          %105 = vsyncadd [#allocation3], %s104
          %s106 = sshll.u32 [#allocation2], 4
          %s107 = int_to_ptr.vmem [resolvable:$true] %s106
          %112 = dma.hbm_to_vmem [thread:$0]  %s1, 512, %s107, [#allocation3], 128, 128, 8
        $region16: #{tpu_custom_call.1} parent=11 // pred_fallthru
          _
      $region12: #{tpu_custom_call.1} parent=5 // pred_fallthru
        _
      %p113 = scmp.lt.s32.totalorder %s12, 2
      // Predicated region
      $region17: #{tpu_custom_call.1} parent=5 // pred_check
        %p114 = pneg %p113
      $region18: #{tpu_custom_call.1} parent=5 // pred_check_branch
        %116 = sbr.rel (%p114) target = $region20
      $region19: #{tpu_custom_call.1} parent=5 // pred_region
        // Predicated region
        $region21: #{tpu_custom_call.1} parent=19 // pred_check
          %p117 = pneg %p32
        $region22: #{tpu_custom_call.1} parent=19 // pred_check_branch
          %119 = sbr.rel (%p117) target = $region24
        $region23: #{tpu_custom_call.1} parent=19 // pred_region
          %p120 = scmp.lt.s32.totalorder %s12, 1
          %s121 = scalar_select %p120, %s12, 1
          %s122 = smul.addr %s121, 8
          %s123 = scalar_lea.vmem %s0, %s122
        $region24: #{tpu_custom_call.1} parent=19 // pred_fallthru
          _
      $region20: #{tpu_custom_call.1} parent=5 // pred_fallthru
        _
      %p124 = scmp.le.s32.totalorder 1, %s12
      %p125 = scmp.lt.s32.totalorder %s12, 3
      %p126 = pnand %p124, %p125
      %p127 = pneg %p126
      // Predicated region
      $region25: #{tpu_custom_call.1} parent=5 // pred_check
        _
      $region26: #{tpu_custom_call.1} parent=5 // pred_check_branch
        %129 = sbr.rel (%p126) target = $region28
      $region27: #{tpu_custom_call.1} parent=5 // pred_region
        %s130 = ssub.s32 %s12, 1
        // Predicated region
        $region29: #{tpu_custom_call.1} parent=27 // pred_check
          %p131 = pneg %p59
        $region30: #{tpu_custom_call.1} parent=27 // pred_check_branch
          %133 = sbr.rel (%p131) target = $region32
        $region31: #{tpu_custom_call.1} parent=27 // pred_region
          %134 = dma.done [#allocation3], 512
        $region32: #{tpu_custom_call.1} parent=27 // pred_fallthru
          _
        %p135 = scmp.lt.s32.totalorder %s17, 1
        %s136 = scalar_select %p135, %s17, 1
        %s137 = smul.addr %s136, 8
        %s138 = scalar_lea.vmem %s0, %s137
        %p139 = pneg %p38
        %p140 = pneg %p35
        %p141 = pneg %p59
        %p142 = pneg %p56
        %p143 = pneg %p85
        %p144 = pneg %p82
        %s145 = sand.u32 %s72, 1
        %s146 = scalar_lea.sflag [#allocation4], %s145
        %s147 = sand.u32 %s72, 1
        %s148 = smul.addr %s147, 8
        %s149 = scalar_lea.vmem [#allocation5], %s148
        %p150 = scmp.lt.s32.totalorder %s17, 1
        %s151 = scalar_select %p150, %s17, 1
        %s152 = smul.addr %s151, 8
        %s153 = scalar_lea.vmem %s0, %s152
        %v154 = vld [vmem:[%s153] sm:$0xff]
        %v155 = vlaneseq
        %v156 = vand.u32 %v155, 127
        %157 = vset.pattern.permute.xlu0 0
        %158 = vperm.xlu0 %157, %v154
        %v159 = vpop.permute.xlu0 %158
        %vm160 = vcmp.eq.s32.totalorder %v159, %v156
        %v161 = vsel %vm160, 1, 0
        %v162 = vcvt.s32.f32 %v161
        %v163 = vld [vmem:[#allocation2] sm:$0xff]
        %v164 = vld [vmem:[#allocation2 + $0x8] sm:$0xff]
        %v165 = vld [vmem:[#allocation2 + $0x10] sm:$0xff]
        %v166 = vld [vmem:[#allocation2 + $0x18] sm:$0xff]
        %vm167 = vcmask 261120
        %v169 = vsel %vm167, %v162, 0
        %171 = vmatprep.subr.mxu0 0.0
        %172 = vmatpush1.msra.mxu0 %v163
        %173 = vmatprep.subr.mxu0 0.0
        %174 = vmatpush1.msra.mxu0 %v164
        %175 = vmatprep.subr.mxu0 0.0
        %176 = vmatpush1.msra.mxu0 %v165
        %177 = vmatprep.subr.mxu0 0.0
        %178 = vmatpush1.msra.mxu0 %v166
        %179 = vmatprep.subr.mxu0 0.0
        %180 = vmatpush1.msra.mxu0 0.0
        %181 = vmatprep.subr.mxu0 0.0
        %182 = vmatpush1.msra.mxu0 0.0
        %183 = vmatprep.subr.mxu0 0.0
        %184 = vmatpush1.msra.mxu0 0.0
        %185 = vmatprep.subr.mxu0 0.0
        %186 = vmatpush1.msra.mxu0 0.0
        %187 = vmatprep.subr.mxu0 0.0
        %188 = vmatpush1.msra.mxu0 0.0
        %189 = vmatprep.subr.mxu0 0.0
        %190 = vmatpush1.msra.mxu0 0.0
        %191 = vmatprep.subr.mxu0 0.0
        %192 = vmatpush1.msra.mxu0 0.0
        %193 = vmatprep.subr.mxu0 0.0
        %194 = vmatpush1.msra.mxu0 0.0
        %195 = vmatprep.subr.mxu0 0.0
        %196 = vmatpush1.msra.mxu0 0.0
        %197 = vmatprep.subr.mxu0 0.0
        %198 = vmatpush1.msra.mxu0 0.0
        %199 = vmatprep.subr.mxu0 0.0
        %200 = vmatpush1.msra.mxu0 0.0
        %201 = vmatprep.subr.mxu0 0.0
        %202 = vmatpush1.msra.mxu0 0.0
        %203 = vmatprep.subr.mxu0 0.0
        %204 = vmatpush1.msra.mxu0 0.0
        %205 = vmatprep.subr.mxu0 0.0
        %206 = vmatpush1.msra.mxu0 0.0
        %207 = vmatprep.subr.mxu0 0.0
        %208 = vmatpush1.msra.mxu0 0.0
        %209 = vmatprep.subr.mxu0 0.0
        %210 = vmatpush1.msra.mxu0 0.0
        %211 = vmatprep.subr.mxu0 0.0
        %212 = vmatpush1.msra.mxu0 0.0
        %213 = vmatprep.subr.mxu0 0.0
        %214 = vmatpush1.msra.mxu0 0.0
        %215 = vmatprep.subr.mxu0 0.0
        %216 = vmatpush1.msra.mxu0 0.0
        %217 = vmatprep.subr.mxu0 0.0
        %218 = vmatpush1.msra.mxu0 0.0
        %219 = vmatprep.subr.mxu0 0.0
        %220 = vmatpush1.msra.mxu0 0.0
        %221 = vmatprep.subr.mxu0 0.0
        %222 = vmatpush1.msra.mxu0 0.0
        %223 = vmatprep.subr.mxu0 0.0
        %224 = vmatpush1.msra.mxu0 0.0
        %225 = vmatprep.subr.mxu0 0.0
        %226 = vmatpush1.msra.mxu0 0.0
        %227 = vmatprep.subr.mxu0 0.0
        %228 = vmatpush1.msra.mxu0 0.0
        %229 = vmatprep.subr.mxu0 0.0
        %230 = vmatpush1.msra.mxu0 0.0
        %231 = vmatprep.subr.mxu0 0.0
        %232 = vmatpush1.msra.mxu0 0.0
        %233 = vmatprep.subr.mxu0 0.0
        %234 = vmatpush1.msra.mxu0 0.0
        %235 = vmatprep.mubr.f32.mxu0 0.0
        %236 = vmatmul.mubr.f32.gmra.mrb[0].mxu0 %v169
        %v237 = vpop.f32.mrb[0].mxu0
        %v238 = vadd.f32 0.0, %v237
        %v239 = vpop.f32.mrb[0].mxu0
        %240 = vdwg.mxu0
        %vm241 = vcmask 523264
        %242 = vst.msk [vmem:[%s149] sm:$0xff] %vm241, %v238
        %s243 = sand.u32 %s72, 1
        %s244 = scalar_lea.sflag [#allocation4], %s243
        %s245 = sand.u32 %s72, 1
        %s246 = smul.addr %s245, 8
        %s247 = scalar_lea.vmem [#allocation5], %s246
        // Predicated region
        $region33: #{tpu_custom_call.1} parent=27 // pred_check
          %p248 = pneg %p82
        $region34: #{tpu_custom_call.1} parent=27 // pred_check_branch
          %250 = sbr.rel (%p248) target = $region36
        $region35: #{tpu_custom_call.1} parent=27 // pred_region
          %s252 = ssub.s32 128, 128
          %253 = vsyncadd %s244, %s252
          %s254 = smul.addr %s17, 128
          %s255 = scalar_lea.hbm %s2, %s254
          %s257 = sshll.u32 %s247, 4
          %s258 = int_to_ptr.vmem [resolvable:$true] %s257
          %260 = dma.vmem_to_hbm [thread:$0]  %s258, 128, %s255, %s244
        $region36: #{tpu_custom_call.1} parent=27 // pred_fallthru
          _
      $region28: #{tpu_custom_call.1} parent=5 // pred_fallthru
        _
      %p261 = scmp.le.s32.totalorder 2, %s12
      // Predicated region
      $region37: #{tpu_custom_call.1} parent=5 // pred_check
        %p262 = pneg %p261
      $region38: #{tpu_custom_call.1} parent=5 // pred_check_branch
        %264 = sbr.rel (%p262) target = $region40
      $region39: #{tpu_custom_call.1} parent=5 // pred_region
        %s265 = ssub.s32 %s12, 2
        // Predicated region
        $region41: #{tpu_custom_call.1} parent=39 // pred_check
          %p266 = pneg %p88
        $region42: #{tpu_custom_call.1} parent=39 // pred_check_branch
          %268 = sbr.rel (%p266) target = $region44
        $region43: #{tpu_custom_call.1} parent=39 // pred_region
          %s269 = sand.u32 %s73, 1
          %s270 = scalar_lea.sflag [#allocation4], %s269
          %s271 = sand.u32 %s73, 1
          %s272 = smul.addr %s271, 8
          %s273 = scalar_lea.vmem [#allocation5], %s272
          %274 = dma.done %s270, 128
        $region44: #{tpu_custom_call.1} parent=39 // pred_fallthru
          _
      $region40: #{tpu_custom_call.1} parent=5 // pred_fallthru
        _
    $region6: #{tpu_custom_call.1} parent=1 // loop_footer
      %s16 = sadd.s32 1, %s12
    $region7: #{tpu_custom_call.1} parent=1 // loop_footer_branch
      %11 = sbr.rel target = $region3
    $region8: #{tpu_custom_call.1} parent=1 // loop_exit
      _
    %275 = vsyncpa [#allocation3], 1
    %s276 = scalar_lea.sflag [#allocation3], 1
    %277 = vsyncpa %s276, 1
    %278 = vsyncpa [#allocation4], 1
    %s279 = scalar_lea.sflag [#allocation4], 1
    %280 = vsyncpa %s279, 1

</llo_original>
